<compile_context>
chip_gen: v6e
topology: v6e:2x2x1
jax: 0.10.0
libtpu: 0.0.40
codegen_flags: <defaults>
</compile_context>

<pallas_src>
import math
import jax
import jax.numpy as jnp
from jax.experimental import pallas as pl
from jax.experimental.pallas import tpu as pltpu


def _decoder_kernel(x_ref, pm_ref, dp_ref, wT_ref, o_ref):
    # x_ref : [TM, D]   latent tile
    # pm_ref: [TM, 2]   col 0 = pos, col 1 = mask
    # dp_ref: [2, D]    row 0 = div_full (div_term[j//2]), row 1 = phase (0 for even j, pi/2 for odd j)
    # wT_ref: [D, Np]   transposed (and N-padded) Linear weight, VMEM-resident across the grid
    # o_ref : [TM, Np]  output tile (lane-dense, Np multiple of 128)
    pos = pm_ref[:, 0:1]                        # [TM, 1]
    mask = pm_ref[:, 1:2]                       # [TM, 1]
    div = dp_ref[0:1, :]                        # [1, D]
    phase = dp_ref[1:2, :]                      # [1, D]
    # Interleaved sin/cos PE with a single transcendental: sin(x + pi/2) == cos(x).
    pe = jnp.sin(pos * div + phase)             # [TM, D]
    # Fold the per-row output mask into the matmul LHS (exact, mask broadcasts over features).
    xc = (x_ref[...] - pe) * mask               # [TM, D]
    o_ref[...] = jnp.dot(xc, wT_ref[...], preferred_element_type=jnp.float32)


def decoder_forward(x, pos, mask, weight, *, tm=256):
    """x: [B,S,D] f32, pos: [B,S] f32, mask: [B,S,1] f32, weight: [N,D] f32."""
    B, S, D = x.shape
    N = weight.shape[0]
    assert D % 2 == 0, "PE interleave assumes even latent_dim (matches d_model=64)"
    M = B * S

    # Tile size along M: multiple of 8, capped at `tm` (sized for v7x's 64 MiB VMEM).
    TM = min(tm, max(8, ((M + 7) // 8) * 8))
    M_pad = ((M + TM - 1) // TM) * TM
    N_pad = ((N + 127) // 128) * 128            # lane-dense output slab (383 -> 384)

    x2 = x.reshape(M, D).astype(jnp.float32)
    pos2 = pos.reshape(M, 1).astype(jnp.float32)
    mask2 = mask.reshape(M, 1).astype(jnp.float32)
    pm = jnp.concatenate([pos2, mask2], axis=1)  # [M, 2] packed side array

    if M_pad != M:
        x2 = jnp.pad(x2, ((0, M_pad - M), (0, 0)))
        pm = jnp.pad(pm, ((0, M_pad - M), (0, 0)))  # padded mask=0 -> padded rows output 0

    wT = weight.T.astype(jnp.float32)            # [D, N]
    if N_pad != N:
        wT = jnp.pad(wT, ((0, 0), (0, N_pad - N)))

    # PE constants (glue, plain JAX):
    div_term = jnp.exp(jnp.arange(0, D, 2, dtype=jnp.float32)
                       * (-math.log(10000.0) / D))             # [D//2]
    col = jnp.arange(D)
    div_full = div_term[col // 2]                               # [D]
    phase = jnp.where(col % 2 == 1,
                      jnp.float32(math.pi / 2), jnp.float32(0.0))
    dp = jnp.stack([div_full, phase], axis=0).astype(jnp.float32)  # [2, D]

    grid = (M_pad // TM,)

    cost = pl.CostEstimate(
        flops=2 * M_pad * D * N_pad,
        transcendentals=M_pad * D,
        bytes_accessed=4 * (M_pad * D + M_pad * 2 + 2 * D
                            + D * N_pad + M_pad * N_pad),
    )

    out = pl.pallas_call(
        _decoder_kernel,
        out_shape=jax.ShapeDtypeStruct((M_pad, N_pad), jnp.float32),
        grid_spec=pltpu.PrefetchScalarGridSpec(
            num_scalar_prefetch=0,
            grid=grid,
            in_specs=[
                pl.BlockSpec((TM, D), lambda i: (i, 0)),        # x tile
                pl.BlockSpec((TM, 2), lambda i: (i, 0)),        # packed pos/mask tile
                pl.BlockSpec((2, D), lambda i: (0, 0)),         # PE constants, resident
                pl.BlockSpec((D, N_pad), lambda i: (0, 0)),     # weight, resident
            ],
            out_specs=pl.BlockSpec((TM, N_pad), lambda i: (i, 0)),
        ),
        compiler_params=pltpu.CompilerParams(
            dimension_semantics=("parallel",)),                 # megacore sharding on v7x
        cost_estimate=cost,
    )(x2, pm, dp, wT)

    return out[:M, :N].reshape(B, S, N)


def decoder_reference(x, pos, mask, weight):
    B, S, D = x.shape
    div_term = jnp.exp(jnp.arange(0, D, 2, dtype=jnp.float32)
                       * (-math.log(10000.0) / D))
    arg = pos[..., None] * div_term[None, None, :]              # [B, S, D//2]
    pe = jnp.zeros((B, S, D), jnp.float32)
    pe = pe.at[:, :, 0::2].set(jnp.sin(arg))
    pe = pe.at[:, :, 1::2].set(jnp.cos(arg))
    y = jnp.einsum("bsd,nd->bsn", x - pe, weight)
    return y * mask


if __name__ == "__main__":
    # Small shapes consistent with the module: latent_dim=64, input_dim=383.
    B, S = 2, 8
    latent_dim, input_dim = 64, 383

    key = jax.random.PRNGKey(0)
    kx, kp, km, kw = jax.random.split(key, 4)

    x = jax.random.normal(kx, (B, S, latent_dim), dtype=jnp.float32)
    pos = jax.random.randint(kp, (B, S), 0, 100).astype(jnp.float32)
    mask = (jax.random.uniform(km, (B, S, 1)) > 0.3).astype(jnp.float32)
    # Deterministic "Linear(latent_dim, input_dim, bias=False)" weight: [N, D]
    bound = 1.0 / math.sqrt(latent_dim)
    weight = jax.random.uniform(kw, (input_dim, latent_dim),
                                minval=-bound, maxval=bound, dtype=jnp.float32)

    out = decoder_forward(x, pos, mask, weight)
    out = jax.block_until_ready(out)

    ref = decoder_reference(x, pos, mask, weight)
    assert out.shape == (B, S, input_dim)
    assert jnp.allclose(out, ref, atol=1e-4, rtol=1e-4), \
        float(jnp.max(jnp.abs(out - ref)))

    print("KERNEL_OK")
</pallas_src>

<mosaic_0001>
module attributes {stable_mosaic.version = 11 : i64} {
  func.func @_decoder_kernel(%arg0: i32, %arg1: memref<16x64xf32, #tpu.memory_space<vmem>>, %arg2: memref<16x2xf32, #tpu.memory_space<vmem>>, %arg3: memref<2x64xf32, #tpu.memory_space<vmem>>, %arg4: memref<64x384xf32, #tpu.memory_space<vmem>>, %arg5: memref<16x384xf32, #tpu.memory_space<vmem>>) attributes {dimension_semantics = [#tpu.dimension_semantics<parallel>], iteration_bounds = array<i64: 1>, scalar_prefetch = 0 : i64, scratch_operands = 0 : i64, tpu.core_type = #tpu.core_type<tc>, window_params = [{transform_indices = @transform_0, window_bounds = array<i64: 16, 64>}, {transform_indices = @transform_1, window_bounds = array<i64: 16, 2>}, {pipeline_mode = #tpu.pipeline_mode<synchronous>, transform_indices = @transform_2, window_bounds = array<i64: 2, 64>}, {pipeline_mode = #tpu.pipeline_mode<synchronous>, transform_indices = @transform_3, window_bounds = array<i64: 64, 384>}, {transform_indices = @transform_4, window_bounds = array<i64: 16, 384>}]} {
    %c0 = arith.constant 0 : index
    %c0_0 = arith.constant 0 : index
    %0 = vector.load %arg2[%c0, %c0_0] : memref<16x2xf32, #tpu.memory_space<vmem>>, vector<16x1xf32>
    %c0_1 = arith.constant 0 : index
    %c1 = arith.constant 1 : index
    %1 = vector.load %arg2[%c0_1, %c1] : memref<16x2xf32, #tpu.memory_space<vmem>>, vector<16x1xf32>
    %c0_2 = arith.constant 0 : index
    %c0_3 = arith.constant 0 : index
    %2 = vector.load %arg3[%c0_2, %c0_3] : memref<2x64xf32, #tpu.memory_space<vmem>>, vector<1x64xf32>
    %c1_4 = arith.constant 1 : index
    %c0_5 = arith.constant 0 : index
    %3 = vector.load %arg3[%c1_4, %c0_5] : memref<2x64xf32, #tpu.memory_space<vmem>>, vector<1x64xf32>
    %4 = vector.broadcast %0 : vector<16x1xf32> to vector<16x64xf32>
    %5 = vector.broadcast %2 : vector<1x64xf32> to vector<16x64xf32>
    %6 = arith.mulf %4, %5 : vector<16x64xf32>
    %7 = vector.broadcast %3 : vector<1x64xf32> to vector<16x64xf32>
    %8 = arith.addf %6, %7 : vector<16x64xf32>
    %9 = math.sin %8 : vector<16x64xf32>
    %c0_6 = arith.constant 0 : index
    %c0_7 = arith.constant 0 : index
    %10 = vector.load %arg1[%c0_6, %c0_7] : memref<16x64xf32, #tpu.memory_space<vmem>>, vector<16x64xf32>
    %11 = arith.subf %10, %9 : vector<16x64xf32>
    %12 = vector.broadcast %1 : vector<16x1xf32> to vector<16x64xf32>
    %13 = arith.mulf %11, %12 : vector<16x64xf32>
    %c0_8 = arith.constant 0 : index
    %c0_9 = arith.constant 0 : index
    %14 = vector.load %arg4[%c0_8, %c0_9] : memref<64x384xf32, #tpu.memory_space<vmem>>, vector<64x384xf32>
    %cst = arith.constant dense<0.000000e+00> : vector<16x384xf32>
    %15 = tpu.matmul %13, %14, %cst {dimension_numbers = #tpu.dot_dimension_numbers<[1], [0], [0], [1], [0, 0, 1, 1], [], []>} : vector<16x64xf32>, vector<64x384xf32>, vector<16x384xf32> -> vector<16x384xf32>
    %c0_10 = arith.constant 0 : index
    %c0_11 = arith.constant 0 : index
    %16 = vector.load %arg5[%c0_10, %c0_11] : memref<16x384xf32, #tpu.memory_space<vmem>>, vector<16x384xf32>
    tpu.vector_store %arg5[%c0_10, %c0_11], %15 {strides = array<i32>} : memref<16x384xf32, #tpu.memory_space<vmem>>, vector<16x384xf32>,
    return
  }
  func.func @transform_0(%arg0: i32) -> (i32, i32) {
    %c0_i32 = arith.constant 0 : i32
    %c0_i32_0 = arith.constant 0 : i32
    return %arg0, %c0_i32 : i32, i32
  }
  func.func @transform_1(%arg0: i32) -> (i32, i32) {
    %c0_i32 = arith.constant 0 : i32
    %c0_i32_0 = arith.constant 0 : i32
    return %arg0, %c0_i32 : i32, i32
  }
  func.func @transform_2(%arg0: i32) -> (i32, i32) {
    %c0_i32 = arith.constant 0 : i32
    %c0_i32_0 = arith.constant 0 : i32
    %c0_i32_1 = arith.constant 0 : i32
    return %c0_i32, %c0_i32_0 : i32, i32
  }
  func.func @transform_3(%arg0: i32) -> (i32, i32) {
    %c0_i32 = arith.constant 0 : i32
    %c0_i32_0 = arith.constant 0 : i32
    %c0_i32_1 = arith.constant 0 : i32
    return %c0_i32, %c0_i32_0 : i32, i32
  }
  func.func @transform_4(%arg0: i32) -> (i32, i32) {
    %c0_i32 = arith.constant 0 : i32
    %c0_i32_0 = arith.constant 0 : i32
    return %arg0, %c0_i32 : i32, i32
  }
}

</mosaic_0001>

<llo_original>
// kernel: tpu_custom_call.1
$region0: #{tpu_custom_call.1}
  #allocation0 [shape = 'u32[]', space=smem, size = 0x4, offset = 0x4, fixed_abs, tag = 'smem constant byte address 0x4 - core index']
  #allocation1 [shape = 'u32[144,128]{1,0:T(1,128)}', space=vmem, size = 0x12000, scoped, tag = 'internal scratch']
  %s0 = inlined_call_operand.vmem [shape: f32[16,64], index: 0, kind: input, shape index: {}]
  %s1 = inlined_call_operand.vmem [shape: f32[16,2], index: 1, kind: input, shape index: {}]
  %s2 = inlined_call_operand.vmem [shape: f32[2,64], index: 2, kind: input, shape index: {}]
  %s3 = inlined_call_operand.hbm [shape: f32[64,384], index: 3, kind: input, shape index: {}]
  %s4 = inlined_call_operand.hbm [shape: f32[16,384], index: 4, kind: output, shape index: {}]
  %s5 = sld [smem:[#allocation0]]
  $region30: #{tpu_custom_call.1} parent=0
    _
  %s7 = ssub.s32 1, %s5
  %s8 = scalar_select 0, %s7, %s5
  $region1: #{tpu_custom_call.1} parent=0
    #allocation2 [shape = 'u8[98304]{0}', space=vmem, size = 0x18000, scoped, tag = 'input window, operand 3, single buffered']
    #allocation3 [shape = 's32[1]{0}', space=sflag, size = 0x4, scoped, tag = 'scoped memory for tpu_custom_call.1']
    #allocation4 [shape = 's32[1]{0}', space=sflag, size = 0x4, scoped, tag = 'scoped memory for tpu_custom_call.1']
    #allocation5 [shape = 'u8[24576]{0}', space=vmem, size = 0x6000, scoped, tag = 'output window, operand 0, single buffered']
    %9 = vsyncpa [#allocation3], 0
    %10 = vsyncpa [#allocation4], 0
    // Predicated region
    $region2: #{tpu_custom_call.1} parent=1 // pred_check
      _
    $region3: #{tpu_custom_call.1} parent=1 // pred_check_branch
      %12 = sbr.rel (0) target = $region5
    $region4: #{tpu_custom_call.1} parent=1 // pred_region
      _
    $region5: #{tpu_custom_call.1} parent=1 // pred_fallthru
      _
    // Predicated region
    $region6: #{tpu_custom_call.1} parent=1 // pred_check
      _
    $region7: #{tpu_custom_call.1} parent=1 // pred_check_branch
      %14 = sbr.rel (0) target = $region9
    $region8: #{tpu_custom_call.1} parent=1 // pred_region
      _
    $region9: #{tpu_custom_call.1} parent=1 // pred_fallthru
      _
    // Predicated region
    $region10: #{tpu_custom_call.1} parent=1 // pred_check
      _
    $region11: #{tpu_custom_call.1} parent=1 // pred_check_branch
      %16 = sbr.rel (0) target = $region13
    $region12: #{tpu_custom_call.1} parent=1 // pred_region
      _
    $region13: #{tpu_custom_call.1} parent=1 // pred_fallthru
      _
    // Predicated region
    $region14: #{tpu_custom_call.1} parent=1 // pred_check
      _
    $region15: #{tpu_custom_call.1} parent=1 // pred_check_branch
      %18 = sbr.rel (0) target = $region17
    $region16: #{tpu_custom_call.1} parent=1 // pred_region
      %s20 = ssub.s32 3072, 3072
      %21 = vsyncadd [#allocation3], %s20
      %s22 = sshll.u32 [#allocation2], 4
      %s23 = int_to_ptr.vmem [resolvable:$true] %s22
      %28 = dma.hbm_to_vmem [thread:$0]  %s3, 3072, %s23, [#allocation3], 384, 384, 24
    $region17: #{tpu_custom_call.1} parent=1 // pred_fallthru
      _
    // Predicated region
    $region18: #{tpu_custom_call.1} parent=1 // pred_check
      _
    $region19: #{tpu_custom_call.1} parent=1 // pred_check_branch
      %30 = sbr.rel (0) target = $region21
    $region20: #{tpu_custom_call.1} parent=1 // pred_region
      %31 = dma.done [#allocation3], 3072
    $region21: #{tpu_custom_call.1} parent=1 // pred_fallthru
      _
    %v32 = vld [vmem:[%s1] sm:$0xff]
    %v33 = vld [vmem:[%s1 + $0x8] sm:$0xff]
    %v34 = vld [vmem:[%s2] sm:$0x1]
    %v35 = vld [vmem:[%s2 + $0x1] sm:$0x1]
    %37 = vset.pattern.permute.xlu0 0
    %38 = vperm.xlu0 %37, %v32
    %v39 = vpop.permute.xlu0 %38
    %42 = vset.pattern.permute.xlu0 0
    %43 = vperm.xlu0 %42, %v33
    %v44 = vpop.permute.xlu0 %43
    %v46 = vlaneseq
    %v47 = vshrl.u32 %v46, 7
    %v48 = vsub.s32 0, %v47
    %v49 = vrot.slane %v34, %v48
    %v50 = vmul.f32 %v39, %v49
    %v51 = vmul.f32 %v44, %v49
    %v52 = vlaneseq
    %v53 = vshrl.u32 %v52, 7
    %v54 = vsub.s32 0, %v53
    %v55 = vrot.slane %v35, %v54
    %v56 = vadd.f32 %v50, %v55
    %v57 = vadd.f32 %v51, %v55
    %v58 = vand.u32 2147483647, %v56
    %vm59 = vcmp.le.f32.partialorder %v58, 0.7853982
    %vm60 = vcmp.lt.s32.totalorder %v56, 0
    %v61 = vand.u32 %v56, 2139095040
    %v62 = vshrl.u32 %v61, 23
    %v63 = vsub.s32 %v62, 127
    %v64 = vand.u32 2147483647, %v56
    %v65 = vand.u32 %v64, 8388607
    %v66 = vor.u32 %v65, 8388608
    %v67 = vsub.s32 0, %v66
    %v68 = vadd.s32 %v63, 1
    %vm69 = vcmp.gt.s32.totalorder %v68, 0
    %v70 = vsel %vm69, %v68, 0
    %v71 = vshrl.u32 %v70, 5
    %v72 = vand.u32 %v70, 31
    %v73 = vsub.s32 32, %v72
    %v74 = vshrl.u32 683565275, %v73
    %v75 = vshll.u32 683565275, %v72
    %v76 = vshrl.u32 2475754826, %v73
    %v77 = vor.u32 %v75, %v76
    %v78 = vshll.u32 2475754826, %v72
    %v79 = vshrl.u32 2131351028, %v73
    %v80 = vor.u32 %v78, %v79
    %v81 = vshll.u32 2131351028, %v72
    %v82 = vshrl.u32 2102212464, %v73
    %v83 = vor.u32 %v81, %v82
    %v84 = vshll.u32 2102212464, %v72
    %v85 = vshrl.u32 920167782, %v73
    %v86 = vor.u32 %v84, %v85
    %v87 = vshll.u32 920167782, %v72
    %v88 = vshrl.u32 1326507024, %v73
    %v89 = vor.u32 %v87, %v88
    %vm90 = vcmp.lt.s32.totalorder %v71, 1
    %vm91 = vcmp.lt.s32.totalorder %v71, 2
    %vm92 = vcmp.lt.s32.totalorder %v71, 3
    %vm93 = vcmp.lt.s32.totalorder %v71, 4
    %v94 = vsel %vm90, %v74, %v77
    %v95 = vsel %vm93, %v83, 2102212464
    %v96 = vsel %vm92, %v80, %v95
    %v97 = vsel %vm91, %v94, %v96
    %v98 = vsel %vm90, %v77, %v80
    %v99 = vsel %vm93, %v86, 920167782
    %v100 = vsel %vm92, %v83, %v99
    %v101 = vsel %vm91, %v98, %v100
    %v102 = vsel %vm90, %v80, %v83
    %v103 = vsel %vm93, %v89, 1326507024
    %v104 = vsel %vm92, %v86, %v103
    %v105 = vsel %vm91, %v102, %v104
    %v106 = vshll.u32 %v66, 8
    %v107 = vmul.u32.u64.compose %v106, %v105
    %v108 = vextract.low.u32 %v107
    %v109 = vextract.high.u32 %v107
    %v110 = vmul.u32.u64.compose %v106, %v101
    %v111 = vextract.low.u32 %v110
    %v112 = vextract.high.u32 %v110
    %v113 = vmul.u32 %v106, %v97
    %v114 = vadd.s32 %v109, %v111
    %vm115 = vc.u32 %v109, %v111
    %v116 = vadd.s32 %v112, 1
    %v117 = vsel %vm115, %v116, %v112
    %v118 = vadd.s32 %v113, %v117
    %v119 = vadd.s32 %v118, 536870912
    %v120 = vshrl.u32 %v119, 30
    %v121 = vshll.u32 %v120, 30
    %v122 = vsub.s32 %v118, %v121
    %vm123 = vcmp.lt.s32.totalorder %v122, 0
    %v124 = vsub.s32 0, %v122
    %v125 = vsel %vm123, %v124, %v122
    %v126 = vclz %v125
    %v127 = vsub.s32 %v126, 2
    %vm128 = vcmp.gt.s32.totalorder 0, %v127
    %v129 = vsel %vm128, 0, %v127
    %v130 = vsub.s32 32, %v129
    %v131 = vshll.u32 %v122, %v129
    %v132 = vshrl.u32 %v114, %v130
    %v133 = vor.u32 %v131, %v132
    %v134 = vsub.s32 4294967266, %v129
    %v135 = vadd.s32 %v134, 127
    %v136 = vshll.u32 %v135, 23
    %v137 = vor.u32 4788187, %v136
    %v138 = vand.u32 2147483647, %v137
    %v140 = vcvt.s32.f32 %v133
    %v141 = vmul.f32 %v140, %v138
    %v142 = vxor.u32 %v141, 2147483648
    %v143 = vsel %vm60, %v142, %v141
    %v144 = vsub.s32 4, %v120
    %v145 = vsel %vm60, %v144, %v120
    %v146 = vsel %vm59, %v56, %v143
    %v147 = vsel %vm59, 0, %v145
    %v148 = vcosq.f32.pop %v146
    %v149 = vsinq.f32.pop %v146
    %vm150 = vweird.f32 %v56
    %v151 = vadd.s32 %v147, 3
    %v152 = vand.u32 %v151, 3
    %vm153 = vcmp.lt.s32.totalorder %v152, 2
    %vm154 = vcmp.eq.s32.totalorder %v152, 0
    %v155 = vxor.u32 %v149, 2147483648
    %v156 = vsel %vm154, %v148, %v155
    %vm157 = vcmp.eq.s32.totalorder %v152, 2
    %v158 = vxor.u32 %v148, 2147483648
    %v159 = vsel %vm157, %v158, %v149
    %v160 = vsel %vm153, %v156, %v159
    %v161 = vsel %vm150, nan, %v160
    %v162 = vand.u32 2147483647, %v57
    %vm163 = vcmp.le.f32.partialorder %v162, 0.7853982
    %vm164 = vcmp.lt.s32.totalorder %v57, 0
    %v165 = vand.u32 %v57, 2139095040
    %v166 = vshrl.u32 %v165, 23
    %v167 = vsub.s32 %v166, 127
    %v168 = vand.u32 2147483647, %v57
    %v169 = vand.u32 %v168, 8388607
    %v170 = vor.u32 %v169, 8388608
    %v171 = vsub.s32 0, %v170
    %v172 = vadd.s32 %v167, 1
    %vm173 = vcmp.gt.s32.totalorder %v172, 0
    %v174 = vsel %vm173, %v172, 0
    %v175 = vshrl.u32 %v174, 5
    %v176 = vand.u32 %v174, 31
    %v177 = vsub.s32 32, %v176
    %v178 = vshrl.u32 683565275, %v177
    %v179 = vshll.u32 683565275, %v176
    %v180 = vshrl.u32 2475754826, %v177
    %v181 = vor.u32 %v179, %v180
    %v182 = vshll.u32 2475754826, %v176
    %v183 = vshrl.u32 2131351028, %v177
    %v184 = vor.u32 %v182, %v183
    %v185 = vshll.u32 2131351028, %v176
    %v186 = vshrl.u32 2102212464, %v177
    %v187 = vor.u32 %v185, %v186
    %v188 = vshll.u32 2102212464, %v176
    %v189 = vshrl.u32 920167782, %v177
    %v190 = vor.u32 %v188, %v189
    %v191 = vshll.u32 920167782, %v176
    %v192 = vshrl.u32 1326507024, %v177
    %v193 = vor.u32 %v191, %v192
    %vm194 = vcmp.lt.s32.totalorder %v175, 1
    %vm195 = vcmp.lt.s32.totalorder %v175, 2
    %vm196 = vcmp.lt.s32.totalorder %v175, 3
    %vm197 = vcmp.lt.s32.totalorder %v175, 4
    %v198 = vsel %vm194, %v178, %v181
    %v199 = vsel %vm197, %v187, 2102212464
    %v200 = vsel %vm196, %v184, %v199
    %v201 = vsel %vm195, %v198, %v200
    %v202 = vsel %vm194, %v181, %v184
    %v203 = vsel %vm197, %v190, 920167782
    %v204 = vsel %vm196, %v187, %v203
    %v205 = vsel %vm195, %v202, %v204
    %v206 = vsel %vm194, %v184, %v187
    %v207 = vsel %vm197, %v193, 1326507024
    %v208 = vsel %vm196, %v190, %v207
    %v209 = vsel %vm195, %v206, %v208
    %v210 = vshll.u32 %v170, 8
    %v211 = vmul.u32.u64.compose %v210, %v209
    %v212 = vextract.low.u32 %v211
    %v213 = vextract.high.u32 %v211
    %v214 = vmul.u32.u64.compose %v210, %v205
    %v215 = vextract.low.u32 %v214
    %v216 = vextract.high.u32 %v214
    %v217 = vmul.u32 %v210, %v201
    %v218 = vadd.s32 %v213, %v215
    %vm219 = vc.u32 %v213, %v215
    %v220 = vadd.s32 %v216, 1
    %v221 = vsel %vm219, %v220, %v216
    %v222 = vadd.s32 %v217, %v221
    %v223 = vadd.s32 %v222, 536870912
    %v224 = vshrl.u32 %v223, 30
    %v225 = vshll.u32 %v224, 30
    %v226 = vsub.s32 %v222, %v225
    %vm227 = vcmp.lt.s32.totalorder %v226, 0
    %v228 = vsub.s32 0, %v226
    %v229 = vsel %vm227, %v228, %v226
    %v230 = vclz %v229
    %v231 = vsub.s32 %v230, 2
    %vm232 = vcmp.gt.s32.totalorder 0, %v231
    %v233 = vsel %vm232, 0, %v231
    %v234 = vsub.s32 32, %v233
    %v235 = vshll.u32 %v226, %v233
    %v236 = vshrl.u32 %v218, %v234
    %v237 = vor.u32 %v235, %v236
    %v238 = vsub.s32 4294967266, %v233
    %v239 = vadd.s32 %v238, 127
    %v240 = vshll.u32 %v239, 23
    %v241 = vor.u32 4788187, %v240
    %v242 = vand.u32 2147483647, %v241
    %v244 = vcvt.s32.f32 %v237
    %v245 = vmul.f32 %v244, %v242
    %v246 = vxor.u32 %v245, 2147483648
    %v247 = vsel %vm164, %v246, %v245
    %v248 = vsub.s32 4, %v224
    %v249 = vsel %vm164, %v248, %v224
    %v250 = vsel %vm163, %v57, %v247
    %v251 = vsel %vm163, 0, %v249
    %v252 = vcosq.f32.pop %v250
    %v253 = vsinq.f32.pop %v250
    %vm254 = vweird.f32 %v57
    %v255 = vadd.s32 %v251, 3
    %v256 = vand.u32 %v255, 3
    %vm257 = vcmp.lt.s32.totalorder %v256, 2
    %vm258 = vcmp.eq.s32.totalorder %v256, 0
    %v259 = vxor.u32 %v253, 2147483648
    %v260 = vsel %vm258, %v252, %v259
    %vm261 = vcmp.eq.s32.totalorder %v256, 2
    %v262 = vxor.u32 %v252, 2147483648
    %v263 = vsel %vm261, %v262, %v253
    %v264 = vsel %vm257, %v260, %v263
    %v265 = vsel %vm254, nan, %v264
    %v266 = vld [vmem:[%s0] sm:$0xff]
    %v267 = vld [vmem:[%s0 + $0x8] sm:$0xff]
    %v268 = vsub.f32 %v266, %v161
    %v269 = vsub.f32 %v267, %v265
    %270 = vset.pattern.permute.xlu0 1
    %271 = vperm.xlu0 %270, %v32
    %v272 = vpop.permute.xlu0 %271
    %274 = vset.pattern.permute.xlu0 1
    %275 = vperm.xlu0 %274, %v33
    %v276 = vpop.permute.xlu0 %275
    %v278 = vmul.f32 %v268, %v272
    %v279 = vmul.f32 %v269, %v276
    %v280 = vld [vmem:[#allocation2] sm:$0xff]
    %v281 = vld [vmem:[#allocation2 + $0x8] sm:$0xff]
    %v282 = vld [vmem:[#allocation2 + $0x10] sm:$0xff]
    %v283 = vld [vmem:[#allocation2 + $0x18] sm:$0xff]
    %v284 = vld [vmem:[#allocation2 + $0x20] sm:$0xff]
    %v285 = vld [vmem:[#allocation2 + $0x28] sm:$0xff]
    %v286 = vld [vmem:[#allocation2 + $0x30] sm:$0xff]
    %v287 = vld [vmem:[#allocation2 + $0x38] sm:$0xff]
    %v288 = vld [vmem:[#allocation2 + $0x40] sm:$0xff]
    %v289 = vld [vmem:[#allocation2 + $0x48] sm:$0xff]
    %v290 = vld [vmem:[#allocation2 + $0x50] sm:$0xff]
    %v291 = vld [vmem:[#allocation2 + $0x58] sm:$0xff]
    %v292 = vld [vmem:[#allocation2 + $0x60] sm:$0xff]
    %v293 = vld [vmem:[#allocation2 + $0x68] sm:$0xff]
    %v294 = vld [vmem:[#allocation2 + $0x70] sm:$0xff]
    %v295 = vld [vmem:[#allocation2 + $0x78] sm:$0xff]
    %v296 = vld [vmem:[#allocation2 + $0x80] sm:$0xff]
    %v297 = vld [vmem:[#allocation2 + $0x88] sm:$0xff]
    %v298 = vld [vmem:[#allocation2 + $0x90] sm:$0xff]
    %v299 = vld [vmem:[#allocation2 + $0x98] sm:$0xff]
    %v300 = vld [vmem:[#allocation2 + $0xa0] sm:$0xff]
    %v301 = vld [vmem:[#allocation2 + $0xa8] sm:$0xff]
    %v302 = vld [vmem:[#allocation2 + $0xb0] sm:$0xff]
    %v303 = vld [vmem:[#allocation2 + $0xb8] sm:$0xff]
    %vm304 = vcmask 523264
    %v306 = vsel %vm304, %v278, 0
    %v309 = vsel %vm304, %v279, 0
    %311 = vmatprep.subr.mxu0 0.0
    %312 = vmatpush1.msra.mxu0 0.0
    %313 = vmatprep.subr.mxu0 0.0
    %314 = vmatpush1.msra.mxu0 0.0
    %315 = vmatprep.subr.mxu0 0.0
    %316 = vmatpush1.msra.mxu0 0.0
    %317 = vmatprep.subr.mxu0 0.0
    %318 = vmatpush1.msra.mxu0 0.0
    %319 = vmatprep.subr.mxu0 0.0
    %320 = vmatpush1.msra.mxu0 0.0
    %321 = vmatprep.subr.mxu0 0.0
    %322 = vmatpush1.msra.mxu0 0.0
    %323 = vmatprep.subr.mxu0 0.0
    %324 = vmatpush1.msra.mxu0 0.0
    %325 = vmatprep.subr.mxu0 0.0
    %326 = vmatpush1.msra.mxu0 0.0
    %327 = vmatprep.subr.mxu0 %v302
    %328 = vmatpush1.msra.mxu0 %v301
    %329 = vmatprep.subr.mxu0 %v299
    %330 = vmatpush1.msra.mxu0 %v298
    %331 = vmatprep.subr.mxu0 %v296
    %332 = vmatpush1.msra.mxu0 %v295
    %333 = vmatprep.subr.mxu0 %v293
    %334 = vmatpush1.msra.mxu0 %v292
    %335 = vmatprep.subr.mxu0 %v290
    %336 = vmatpush1.msra.mxu0 %v289
    %337 = vmatprep.subr.mxu0 %v287
    %338 = vmatpush1.msra.mxu0 %v286
    %339 = vmatprep.subr.mxu0 %v284
    %340 = vmatpush1.msra.mxu0 %v283
    %341 = vmatprep.subr.mxu0 %v281
    %342 = vmatpush1.msra.mxu0 %v280
    %343 = vmatprep.subr.mxu0 0.0
    %344 = vmatpush2.msra.mxu0 0.0
    %345 = vmatprep.subr.mxu0 0.0
    %346 = vmatpush2.msra.mxu0 0.0
    %347 = vmatprep.subr.mxu0 0.0
    %348 = vmatpush2.msra.mxu0 0.0
    %349 = vmatprep.subr.mxu0 0.0
    %350 = vmatpush2.msra.mxu0 0.0
    %351 = vmatprep.subr.mxu0 0.0
    %352 = vmatpush2.msra.mxu0 0.0
    %353 = vmatprep.subr.mxu0 0.0
    %354 = vmatpush2.msra.mxu0 0.0
    %355 = vmatprep.subr.mxu0 0.0
    %356 = vmatpush2.msra.mxu0 0.0
    %357 = vmatprep.subr.mxu0 0.0
    %358 = vmatpush2.msra.mxu0 0.0
    %359 = vmatprep.subr.mxu0 0.0
    %360 = vmatpush2.msra.mxu0 0.0
    %361 = vmatprep.subr.mxu0 0.0
    %362 = vmatpush2.msra.mxu0 0.0
    %363 = vmatprep.subr.mxu0 0.0
    %364 = vmatpush2.msra.mxu0 0.0
    %365 = vmatprep.subr.mxu0 0.0
    %366 = vmatpush2.msra.mxu0 0.0
    %367 = vmatprep.subr.mxu0 0.0
    %368 = vmatpush2.msra.mxu0 0.0
    %369 = vmatprep.subr.mxu0 0.0
    %370 = vmatpush2.msra.mxu0 0.0
    %371 = vmatprep.subr.mxu0 0.0
    %372 = vmatpush2.msra.mxu0 0.0
    %373 = vmatprep.subr.mxu0 0.0
    %374 = vmatpush2.msra.mxu0 0.0
    %375 = vmatprep.mubr.f32.mxu0 0.0
    %376 = vmatmul.mubr.f32.gmra.mxu0 %v306
    %v377 = vpop.f32.mrf.mxu0
    %v378 = vadd.f32 0.0, %v377
    %v379 = vpop.f32.mrf.mxu0
    %v380 = vadd.f32 0.0, %v379
    %381 = vmatprep.mubr.f32.mxu0 0.0
    %382 = vmatmul.mubr.f32.gmra.mxu0 %v309
    %v383 = vpop.f32.mrf.mxu0
    %v384 = vadd.f32 0.0, %v383
    %v385 = vpop.f32.mrf.mxu0
    %v386 = vadd.f32 0.0, %v385
    %387 = vdwg.mxu0
    %388 = vmatprep.subr.mxu0 0.0
    %389 = vmatpush1.msra.mxu0 0.0
    %390 = vmatprep.subr.mxu0 0.0
    %391 = vmatpush1.msra.mxu0 0.0
    %392 = vmatprep.subr.mxu0 0.0
    %393 = vmatpush1.msra.mxu0 0.0
    %394 = vmatprep.subr.mxu0 0.0
    %395 = vmatpush1.msra.mxu0 0.0
    %396 = vmatprep.subr.mxu0 0.0
    %397 = vmatpush1.msra.mxu0 0.0
    %398 = vmatprep.subr.mxu0 0.0
    %399 = vmatpush1.msra.mxu0 0.0
    %400 = vmatprep.subr.mxu0 0.0
    %401 = vmatpush1.msra.mxu0 0.0
    %402 = vmatprep.subr.mxu0 0.0
    %403 = vmatpush1.msra.mxu0 0.0
    %404 = vmatprep.subr.mxu0 0.0
    %405 = vmatpush1.msra.mxu0 %v303
    %406 = vmatprep.subr.mxu0 0.0
    %407 = vmatpush1.msra.mxu0 %v300
    %408 = vmatprep.subr.mxu0 0.0
    %409 = vmatpush1.msra.mxu0 %v297
    %410 = vmatprep.subr.mxu0 0.0
    %411 = vmatpush1.msra.mxu0 %v294
    %412 = vmatprep.subr.mxu0 0.0
    %413 = vmatpush1.msra.mxu0 %v291
    %414 = vmatprep.subr.mxu0 0.0
    %415 = vmatpush1.msra.mxu0 %v288
    %416 = vmatprep.subr.mxu0 0.0
    %417 = vmatpush1.msra.mxu0 %v285
    %418 = vmatprep.subr.mxu0 0.0
    %419 = vmatpush1.msra.mxu0 %v282
    %420 = vmatprep.subr.mxu0 0.0
    %421 = vmatpush2.msra.mxu0 0.0
    %422 = vmatprep.subr.mxu0 0.0
    %423 = vmatpush2.msra.mxu0 0.0
    %424 = vmatprep.subr.mxu0 0.0
    %425 = vmatpush2.msra.mxu0 0.0
    %426 = vmatprep.subr.mxu0 0.0
    %427 = vmatpush2.msra.mxu0 0.0
    %428 = vmatprep.subr.mxu0 0.0
    %429 = vmatpush2.msra.mxu0 0.0
    %430 = vmatprep.subr.mxu0 0.0
    %431 = vmatpush2.msra.mxu0 0.0
    %432 = vmatprep.subr.mxu0 0.0
    %433 = vmatpush2.msra.mxu0 0.0
    %434 = vmatprep.subr.mxu0 0.0
    %435 = vmatpush2.msra.mxu0 0.0
    %436 = vmatprep.subr.mxu0 0.0
    %437 = vmatpush2.msra.mxu0 0.0
    %438 = vmatprep.subr.mxu0 0.0
    %439 = vmatpush2.msra.mxu0 0.0
    %440 = vmatprep.subr.mxu0 0.0
    %441 = vmatpush2.msra.mxu0 0.0
    %442 = vmatprep.subr.mxu0 0.0
    %443 = vmatpush2.msra.mxu0 0.0
    %444 = vmatprep.subr.mxu0 0.0
    %445 = vmatpush2.msra.mxu0 0.0
    %446 = vmatprep.subr.mxu0 0.0
    %447 = vmatpush2.msra.mxu0 0.0
    %448 = vmatprep.subr.mxu0 0.0
    %449 = vmatpush2.msra.mxu0 0.0
    %450 = vmatprep.subr.mxu0 0.0
    %451 = vmatpush2.msra.mxu0 0.0
    %452 = vmatprep.mubr.f32.mxu0 0.0
    %453 = vmatmul.mubr.f32.gmra.mxu0 %v306
    %v454 = vpop.f32.mrf.mxu0
    %v455 = vadd.f32 0.0, %v454
    %v456 = vpop.f32.mrf.mxu0
    %457 = vmatprep.mubr.f32.mxu0 0.0
    %458 = vmatmul.mubr.f32.gmra.mxu0 %v309
    %v459 = vpop.f32.mrf.mxu0
    %v460 = vadd.f32 0.0, %v459
    %v461 = vpop.f32.mrf.mxu0
    %462 = vdwg.mxu0
    %463 = vst [vmem:[#allocation5] sm:$0xff] %v378
    %464 = vst [vmem:[#allocation5 + $0x8] sm:$0xff] %v380
    %465 = vst [vmem:[#allocation5 + $0x10] sm:$0xff] %v455
    %466 = vst [vmem:[#allocation5 + $0x18] sm:$0xff] %v384
    %467 = vst [vmem:[#allocation5 + $0x20] sm:$0xff] %v386
    %468 = vst [vmem:[#allocation5 + $0x28] sm:$0xff] %v460
    // Predicated region
    $region22: #{tpu_custom_call.1} parent=1 // pred_check
      _
    $region23: #{tpu_custom_call.1} parent=1 // pred_check_branch
      %470 = sbr.rel (0) target = $region25
    $region24: #{tpu_custom_call.1} parent=1 // pred_region
      %s472 = ssub.s32 768, 768
      %473 = vsyncadd [#allocation4], %s472
      %s474 = sshll.u32 [#allocation5], 4
      %s475 = int_to_ptr.vmem [resolvable:$true] %s474
      %480 = dma.vmem_to_hbm [thread:$0]  %s475, 768, %s4, [#allocation4], 384, 384, 24
    $region25: #{tpu_custom_call.1} parent=1 // pred_fallthru
      _
    // Predicated region
    $region26: #{tpu_custom_call.1} parent=1 // pred_check
      _
    $region27: #{tpu_custom_call.1} parent=1 // pred_check_branch
      %482 = sbr.rel (0) target = $region29
    $region28: #{tpu_custom_call.1} parent=1 // pred_region
      %483 = dma.done [#allocation4], 768
    $region29: #{tpu_custom_call.1} parent=1 // pred_fallthru
      _
    %484 = vsyncpa [#allocation3], 1
    %485 = vsyncpa [#allocation4], 1

</llo_original>
